<compile_context>
chip_gen: v6e
topology: v6e:2x2x1
jax: 0.10.0
libtpu: 0.0.40
codegen_flags: <defaults>
</compile_context>

<pallas_src>
import jax
import jax.numpy as jnp
from jax import lax
from jax.experimental import pallas as pl
from jax.experimental.pallas import tpu as pltpu

# ---- synthetic config (mirrors conf/AutoConfig fields used by the module) ----
B, S = 2, 8              # batch, sequence length
H_T, H_S = 32, 16        # teacher / student hidden_size
L_T, L_S = 6, 3          # teacher / student num_hidden_layers
NUM_LABELS = 4           # classification task (non-stsb branch of loss_kd)
PROJ = 8                 # conf['linear']
TEMPERATURE = 2.0        # conf['T']
LAMBDAS = (0.4, 0.3, 0.3)
SELECTED = (1, 3, 5)     # self.selected: teacher layer matched to student layer i

C = NUM_LABELS
T_W = L_T * PROJ                 # width of teacher projections block (48)
S_W = L_S * PROJ                 # width of student projections block (24)
OUT_W = T_W + S_W + 4            # valid packed output width (76)
OUT_PAD = 128                    # lane-dense (unmasked vst) output width


def railkd_l_kernel(logits_ref, t_hs_ref, s_hs_ref, wt_ref, ws_ref, bias_ref,
                    out_ref):
    # ---- unpack consolidated logits/labels input: [B, 3*C] ----
    lp = logits_ref[...]
    t_logits = lp[:, 0 * C:1 * C]
    s_logits = lp[:, 1 * C:2 * C]
    labels_oh = lp[:, 2 * C:3 * C]

    # ---- student cross-entropy (stand-in for `outputs.loss`) ----
    s_max = jnp.max(s_logits, axis=-1, keepdims=True)
    s_shift = s_logits - s_max
    s_ls = s_shift - jnp.log(jnp.sum(jnp.exp(s_shift), axis=-1, keepdims=True))
    ce_rows = -jnp.sum(labels_oh * s_ls, axis=-1, keepdims=True)          # [B,1]
    ce = jnp.sum(ce_rows, axis=0, keepdims=True) * (1.0 / B)              # [1,1]

    # ---- loss_kd: tp = softmax(t)/T, sp = softmax(s)/T, KL(tp || sp), mean ----
    # Computed from log-softmax: log(tp) - log(sp) == t_ls - s_ls (the 1/T cancels).
    # TODO(synk): myfunc.kl_div is undefined in the source; using batch-mean
    #             KL(tp || sp) = mean_b sum_c tp * (log tp - log sp).
    t_max = jnp.max(t_logits, axis=-1, keepdims=True)
    t_shift = t_logits - t_max
    t_ls = t_shift - jnp.log(jnp.sum(jnp.exp(t_shift), axis=-1, keepdims=True))
    tp = jnp.exp(t_ls) * (1.0 / TEMPERATURE)
    kl_rows = jnp.sum(tp * (t_ls - s_ls), axis=-1, keepdims=True)         # [B,1]
    kd = jnp.sum(kl_rows, axis=0, keepdims=True) * (1.0 / B)              # [1,1]

    # ---- RAIL_l_loss ----
    # Hidden states are lane-packed: teacher [B,S,L_T*H_T], student [B,S,L_S*H_S].
    # One sublane mean (mean_pooling over seq) + one block-diagonal matmul per
    # tower reproduces the per-layer ModuleList Linears exactly.
    t_pooled = jnp.mean(t_hs_ref[...], axis=1)                            # [B, L_T*H_T]
    s_pooled = jnp.mean(s_hs_ref[...], axis=1)                            # [B, L_S*H_S]
    bias = bias_ref[...]                                                  # [1, T_W+S_W]
    h_t_all = jnp.dot(t_pooled, wt_ref[...],
                      preferred_element_type=jnp.float32) + bias[:, :T_W]   # [B, T_W]
    h_s_all = jnp.dot(s_pooled, ws_ref[...],
                      preferred_element_type=jnp.float32) + bias[:, T_W:]   # [B, S_W]

    lrail = jnp.zeros((1, 1), jnp.float32)
    for i, layer in enumerate(SELECTED):                 # static unroll, static slices
        u_t = h_t_all[:, layer * PROJ:(layer + 1) * PROJ]                 # [B, P]
        u_s = h_s_all[:, i * PROJ:(i + 1) * PROJ]                         # [B, P]
        n_t = u_t * lax.rsqrt(jnp.sum(u_t * u_t, axis=-1, keepdims=True))
        n_s = u_s * lax.rsqrt(jnp.sum(u_s * u_s, axis=-1, keepdims=True))
        d = n_t - n_s
        rows = jnp.sqrt(jnp.sum(d * d, axis=-1, keepdims=True))           # [B,1]
        lrail = lrail + jnp.sum(rows, axis=0, keepdims=True) * (1.0 / B)
    lrail = lrail * (1.0 / len(SELECTED))

    total = LAMBDAS[0] * ce + LAMBDAS[1] * kd + LAMBDAS[2] * lrail

    # ---- single packed, lane-dense (128-wide) output:
    #      [teacher_all proj | student proj | 4 losses | zero pad] ----
    losses = jnp.concatenate([total, ce, kd, lrail], axis=1)              # [1,4]
    out_ref[...] = jnp.concatenate(
        [h_t_all, h_s_all, jnp.broadcast_to(losses, (B, 4)),
         jnp.zeros((B, OUT_PAD - OUT_W), jnp.float32)], axis=1)


@jax.jit
def railkd_l_forward(logits_pack, t_hs_packed, s_hs_packed, wt_bd, ws_bd,
                     bias_pack):
    vmem = pl.BlockSpec(memory_space=pltpu.MemorySpace.VMEM)
    out = pl.pallas_call(
        railkd_l_kernel,
        out_shape=jax.ShapeDtypeStruct((B, OUT_PAD), jnp.float32),
        in_specs=[vmem] * 6,
        out_specs=vmem,
    )(logits_pack, t_hs_packed, s_hs_packed, wt_bd, ws_bd, bias_pack)

    # host-side glue: unpack the single output tile
    h_hat_t_all = out[:, :T_W].reshape(B, L_T, PROJ)       # linear_states['teacher_all']
    h_hat_s = out[:, T_W:T_W + S_W].reshape(B, L_S, PROJ)  # linear_states['student']
    h_hat_t_sel = h_hat_t_all[:, jnp.array(SELECTED), :]   # linear_states['teacher']
    losses = out[0, T_W + S_W:T_W + S_W + 4]               # [total, ce, kd, lrail]
    return losses, h_hat_t_all, h_hat_s, h_hat_t_sel


def ref_forward(t_logits, s_logits, labels_oh, t_hs, s_hs,
                wt_layers, bt_layers, ws_layers, bs_layers):
    """Plain-JAX reference matching RAILKD_l_Model.forward math."""
    # CE (stand-in for HF outputs.loss on classification)
    s_ls = jax.nn.log_softmax(s_logits, axis=-1)
    ce = jnp.mean(-jnp.sum(labels_oh * s_ls, axis=-1))

    # KD
    tp = jax.nn.softmax(t_logits, axis=1) / TEMPERATURE
    sp = jax.nn.softmax(s_logits, axis=1) / TEMPERATURE
    kd = jnp.mean(jnp.sum(tp * (jnp.log(tp) - jnp.log(sp)), axis=-1))

    # RAIL_l_loss (per-layer ModuleList Linears)
    h_bar_t = jnp.mean(t_hs, axis=2)                       # [L_T, B, H_T]
    h_bar_s = jnp.mean(s_hs, axis=2)                       # [L_S, B, H_S]
    h_hats_t = jnp.stack(
        [h_bar_t[l] @ wt_layers[l] + bt_layers[l] for l in range(L_T)], axis=1)
    h_hats_s = jnp.stack(
        [h_bar_s[i] @ ws_layers[i] + bs_layers[i] for i in range(L_S)], axis=1)

    lrail = 0.0
    for i, layer in enumerate(SELECTED):
        ht = h_hats_t[:, layer]
        hs = h_hats_s[:, i]
        nt = ht / jnp.linalg.norm(ht, axis=1, keepdims=True)
        ns = hs / jnp.linalg.norm(hs, axis=1, keepdims=True)
        lrail = lrail + jnp.mean(jnp.linalg.norm(nt - ns, axis=1))
    lrail = lrail / len(SELECTED)

    total = LAMBDAS[0] * ce + LAMBDAS[1] * kd + LAMBDAS[2] * lrail
    return jnp.stack([total, ce, kd, lrail]), h_hats_t, h_hats_s


def _block_diag(blocks):
    h, p = blocks[0].shape
    n = len(blocks)
    out = jnp.zeros((n * h, n * p), blocks[0].dtype)
    for l, blk in enumerate(blocks):
        out = out.at[l * h:(l + 1) * h, l * p:(l + 1) * p].set(blk)
    return out


if __name__ == "__main__":
    key = jax.random.PRNGKey(0)
    keys = jax.random.split(key, 9)

    # TODO(synk): HF teacher/student backbones are not re-implemented; their
    #             logits / hidden_states[1:] are modeled as synthetic tensors.
    t_logits = jax.random.normal(keys[0], (B, NUM_LABELS), jnp.float32)
    s_logits = jax.random.normal(keys[1], (B, NUM_LABELS), jnp.float32)
    labels = jax.random.randint(keys[2], (B,), 0, NUM_LABELS)
    labels_oh = jax.nn.one_hot(labels, NUM_LABELS, dtype=jnp.float32)
    t_hs = jax.random.normal(keys[3], (L_T, B, S, H_T), jnp.float32)
    s_hs = jax.random.normal(keys[4], (L_S, B, S, H_S), jnp.float32)

    # Per-layer Linear params (torch ModuleList; weights stored as [in, out]).
    wt_layers = 0.05 * jax.random.normal(keys[5], (L_T, H_T, PROJ), jnp.float32)
    bt_layers = 0.01 * jax.random.normal(keys[6], (L_T, PROJ), jnp.float32)
    ws_layers = 0.05 * jax.random.normal(keys[7], (L_S, H_S, PROJ), jnp.float32)
    bs_layers = 0.01 * jax.random.normal(keys[8], (L_S, PROJ), jnp.float32)

    # ---- host-side layout plumbing ----
    # consolidate tiny logit/label inputs into one [B, 3*C] array
    logits_pack = jnp.concatenate([t_logits, s_logits, labels_oh], axis=1)
    # pack the layer axis into lanes: [L,B,S,H] -> [B,S,L*H]
    t_hs_packed = jnp.transpose(t_hs, (1, 2, 0, 3)).reshape(B, S, L_T * H_T)
    s_hs_packed = jnp.transpose(s_hs, (1, 2, 0, 3)).reshape(B, S, L_S * H_S)
    # per-layer Linears -> one block-diagonal weight per tower
    wt_bd = _block_diag([wt_layers[l] for l in range(L_T)])   # [L_T*H_T, L_T*P]
    ws_bd = _block_diag([ws_layers[i] for i in range(L_S)])   # [L_S*H_S, L_S*P]
    bias_pack = jnp.concatenate(
        [bt_layers.reshape(1, T_W), bs_layers.reshape(1, S_W)], axis=1)

    losses, h_hat_t_all, h_hat_s, h_hat_t_sel = railkd_l_forward(
        logits_pack, t_hs_packed, s_hs_packed, wt_bd, ws_bd, bias_pack)
    jax.block_until_ready((losses, h_hat_t_all, h_hat_s, h_hat_t_sel))

    ref_losses, ref_ht_all, ref_hs_all = ref_forward(
        t_logits, s_logits, labels_oh, t_hs, s_hs,
        wt_layers, bt_layers, ws_layers, bs_layers)

    assert jnp.allclose(losses, ref_losses, rtol=1e-4, atol=1e-4), (losses, ref_losses)
    assert jnp.allclose(h_hat_t_all, ref_ht_all, rtol=1e-4, atol=1e-4)
    assert jnp.allclose(h_hat_s, ref_hs_all, rtol=1e-4, atol=1e-4)
    assert jnp.allclose(h_hat_t_sel, ref_ht_all[:, jnp.array(SELECTED), :],
                        rtol=1e-4, atol=1e-4)

    print("KERNEL_OK")
</pallas_src>

<mosaic_0001>
module attributes {stable_mosaic.version = 11 : i64} {
  func.func @railkd_l_kernel(%arg0: memref<2x12xf32, #tpu.memory_space<vmem>>, %arg1: memref<2x8x192xf32, #tpu.memory_space<vmem>>, %arg2: memref<2x8x48xf32, #tpu.memory_space<vmem>>, %arg3: memref<192x48xf32, #tpu.memory_space<vmem>>, %arg4: memref<48x24xf32, #tpu.memory_space<vmem>>, %arg5: memref<1x72xf32, #tpu.memory_space<vmem>>, %arg6: memref<2x128xf32, #tpu.memory_space<vmem>>) attributes {dimension_semantics = [], scalar_prefetch = 0 : i64, scratch_operands = 0 : i64, tpu.core_type = #tpu.core_type<tc>} {
    %c0 = arith.constant 0 : index
    %c0_0 = arith.constant 0 : index
    %0 = vector.load %arg0[%c0, %c0_0] : memref<2x12xf32, #tpu.memory_space<vmem>>, vector<2x12xf32>
    %1 = vector.extract_strided_slice %0 {offsets = [0, 0], sizes = [2, 4], strides = [1, 1]} : vector<2x12xf32> to vector<2x4xf32>
    %2 = vector.extract_strided_slice %0 {offsets = [0, 4], sizes = [2, 4], strides = [1, 1]} : vector<2x12xf32> to vector<2x4xf32>
    %3 = vector.extract_strided_slice %0 {offsets = [0, 8], sizes = [2, 4], strides = [1, 1]} : vector<2x12xf32> to vector<2x4xf32>
    %cst = arith.constant dense<0xFF800000> : vector<2xf32>
    %4 = vector.multi_reduction <maximumf>, %2, %cst [1] : vector<2x4xf32> to vector<2xf32>
    %5 = vector.shape_cast %4 : vector<2xf32> to vector<2x1xf32>
    %6 = vector.broadcast %5 : vector<2x1xf32> to vector<2x4xf32>
    %7 = arith.subf %2, %6 : vector<2x4xf32>
    %8 = math.exp %7 : vector<2x4xf32>
    %cst_1 = arith.constant dense<0.000000e+00> : vector<2xf32>
    %9 = vector.multi_reduction <add>, %8, %cst_1 [1] : vector<2x4xf32> to vector<2xf32>
    %10 = vector.shape_cast %9 : vector<2xf32> to vector<2x1xf32>
    %11 = math.log %10 : vector<2x1xf32>
    %12 = vector.broadcast %11 : vector<2x1xf32> to vector<2x4xf32>
    %13 = arith.subf %7, %12 : vector<2x4xf32>
    %14 = arith.mulf %3, %13 : vector<2x4xf32>
    %cst_2 = arith.constant dense<0.000000e+00> : vector<2xf32>
    %15 = vector.multi_reduction <add>, %14, %cst_2 [1] : vector<2x4xf32> to vector<2xf32>
    %16 = vector.shape_cast %15 : vector<2xf32> to vector<2x1xf32>
    %cst_3 = arith.constant 0.000000e+00 : f32
    %17 = vector.broadcast %cst_3 : f32 to vector<2x1xf32>
    %18 = arith.subf %17, %16 : vector<2x1xf32>
    %cst_4 = arith.constant dense<0.000000e+00> : vector<1xf32>
    %19 = vector.multi_reduction <add>, %18, %cst_4 [0] : vector<2x1xf32> to vector<1xf32>
    %20 = vector.shape_cast %19 : vector<1xf32> to vector<1x1xf32>
    %cst_5 = arith.constant 5.000000e-01 : f32
    %21 = vector.broadcast %cst_5 : f32 to vector<1x1xf32>
    %22 = arith.mulf %20, %21 : vector<1x1xf32>
    %cst_6 = arith.constant dense<0xFF800000> : vector<2xf32>
    %23 = vector.multi_reduction <maximumf>, %1, %cst_6 [1] : vector<2x4xf32> to vector<2xf32>
    %24 = vector.shape_cast %23 : vector<2xf32> to vector<2x1xf32>
    %25 = vector.broadcast %24 : vector<2x1xf32> to vector<2x4xf32>
    %26 = arith.subf %1, %25 : vector<2x4xf32>
    %27 = math.exp %26 : vector<2x4xf32>
    %cst_7 = arith.constant dense<0.000000e+00> : vector<2xf32>
    %28 = vector.multi_reduction <add>, %27, %cst_7 [1] : vector<2x4xf32> to vector<2xf32>
    %29 = vector.shape_cast %28 : vector<2xf32> to vector<2x1xf32>
    %30 = math.log %29 : vector<2x1xf32>
    %31 = vector.broadcast %30 : vector<2x1xf32> to vector<2x4xf32>
    %32 = arith.subf %26, %31 : vector<2x4xf32>
    %33 = math.exp %32 : vector<2x4xf32>
    %cst_8 = arith.constant 5.000000e-01 : f32
    %34 = vector.broadcast %cst_8 : f32 to vector<2x4xf32>
    %35 = arith.mulf %33, %34 : vector<2x4xf32>
    %36 = arith.subf %32, %13 : vector<2x4xf32>
    %37 = arith.mulf %35, %36 : vector<2x4xf32>
    %cst_9 = arith.constant dense<0.000000e+00> : vector<2xf32>
    %38 = vector.multi_reduction <add>, %37, %cst_9 [1] : vector<2x4xf32> to vector<2xf32>
    %39 = vector.shape_cast %38 : vector<2xf32> to vector<2x1xf32>
    %cst_10 = arith.constant dense<0.000000e+00> : vector<1xf32>
    %40 = vector.multi_reduction <add>, %39, %cst_10 [0] : vector<2x1xf32> to vector<1xf32>
    %41 = vector.shape_cast %40 : vector<1xf32> to vector<1x1xf32>
    %cst_11 = arith.constant 5.000000e-01 : f32
    %42 = vector.broadcast %cst_11 : f32 to vector<1x1xf32>
    %43 = arith.mulf %41, %42 : vector<1x1xf32>
    %c0_12 = arith.constant 0 : index
    %c0_13 = arith.constant 0 : index
    %c0_14 = arith.constant 0 : index
    %44 = vector.load %arg1[%c0_12, %c0_13, %c0_14] : memref<2x8x192xf32, #tpu.memory_space<vmem>>, vector<2x8x192xf32>
    %cst_15 = arith.constant dense<0.000000e+00> : vector<2x192xf32>
    %45 = vector.multi_reduction <add>, %44, %cst_15 [1] : vector<2x8x192xf32> to vector<2x192xf32>
    %cst_16 = arith.constant 8.000000e+00 : f32
    %46 = vector.broadcast %cst_16 : f32 to vector<2x192xf32>
    %47 = arith.divf %45, %46 : vector<2x192xf32>
    %c0_17 = arith.constant 0 : index
    %c0_18 = arith.constant 0 : index
    %c0_19 = arith.constant 0 : index
    %48 = vector.load %arg2[%c0_17, %c0_18, %c0_19] : memref<2x8x48xf32, #tpu.memory_space<vmem>>, vector<2x8x48xf32>
    %cst_20 = arith.constant dense<0.000000e+00> : vector<2x48xf32>
    %49 = vector.multi_reduction <add>, %48, %cst_20 [1] : vector<2x8x48xf32> to vector<2x48xf32>
    %cst_21 = arith.constant 8.000000e+00 : f32
    %50 = vector.broadcast %cst_21 : f32 to vector<2x48xf32>
    %51 = arith.divf %49, %50 : vector<2x48xf32>
    %c0_22 = arith.constant 0 : index
    %c0_23 = arith.constant 0 : index
    %52 = vector.load %arg5[%c0_22, %c0_23] : memref<1x72xf32, #tpu.memory_space<vmem>>, vector<1x72xf32>
    %c0_24 = arith.constant 0 : index
    %c0_25 = arith.constant 0 : index
    %53 = vector.load %arg3[%c0_24, %c0_25] : memref<192x48xf32, #tpu.memory_space<vmem>>, vector<192x48xf32>
    %cst_26 = arith.constant dense<0.000000e+00> : vector<2x48xf32>
    %54 = tpu.matmul %47, %53, %cst_26 {dimension_numbers = #tpu.dot_dimension_numbers<[1], [0], [0], [1], [0, 0, 1, 1], [], []>} : vector<2x192xf32>, vector<192x48xf32>, vector<2x48xf32> -> vector<2x48xf32>
    %55 = vector.extract_strided_slice %52 {offsets = [0, 0], sizes = [1, 48], strides = [1, 1]} : vector<1x72xf32> to vector<1x48xf32>
    %56 = vector.broadcast %55 : vector<1x48xf32> to vector<2x48xf32>
    %57 = arith.addf %54, %56 : vector<2x48xf32>
    %c0_27 = arith.constant 0 : index
    %c0_28 = arith.constant 0 : index
    %58 = vector.load %arg4[%c0_27, %c0_28] : memref<48x24xf32, #tpu.memory_space<vmem>>, vector<48x24xf32>
    %cst_29 = arith.constant dense<0.000000e+00> : vector<2x24xf32>
    %59 = tpu.matmul %51, %58, %cst_29 {dimension_numbers = #tpu.dot_dimension_numbers<[1], [0], [0], [1], [0, 0, 1, 1], [], []>} : vector<2x48xf32>, vector<48x24xf32>, vector<2x24xf32> -> vector<2x24xf32>
    %60 = vector.extract_strided_slice %52 {offsets = [0, 48], sizes = [1, 24], strides = [1, 1]} : vector<1x72xf32> to vector<1x24xf32>
    %61 = vector.broadcast %60 : vector<1x24xf32> to vector<2x24xf32>
    %62 = arith.addf %59, %61 : vector<2x24xf32>
    %cst_30 = arith.constant 0.000000e+00 : f32
    %63 = vector.broadcast %cst_30 : f32 to vector<1x1xf32>
    %64 = vector.extract_strided_slice %57 {offsets = [0, 8], sizes = [2, 8], strides = [1, 1]} : vector<2x48xf32> to vector<2x8xf32>
    %65 = vector.extract_strided_slice %62 {offsets = [0, 0], sizes = [2, 8], strides = [1, 1]} : vector<2x24xf32> to vector<2x8xf32>
    %66 = arith.mulf %64, %64 : vector<2x8xf32>
    %cst_31 = arith.constant dense<0.000000e+00> : vector<2xf32>
    %67 = vector.multi_reduction <add>, %66, %cst_31 [1] : vector<2x8xf32> to vector<2xf32>
    %68 = vector.shape_cast %67 : vector<2xf32> to vector<2x1xf32>
    %69 = math.rsqrt %68 : vector<2x1xf32>
    %70 = vector.broadcast %69 : vector<2x1xf32> to vector<2x8xf32>
    %71 = arith.mulf %64, %70 : vector<2x8xf32>
    %72 = arith.mulf %65, %65 : vector<2x8xf32>
    %cst_32 = arith.constant dense<0.000000e+00> : vector<2xf32>
    %73 = vector.multi_reduction <add>, %72, %cst_32 [1] : vector<2x8xf32> to vector<2xf32>
    %74 = vector.shape_cast %73 : vector<2xf32> to vector<2x1xf32>
    %75 = math.rsqrt %74 : vector<2x1xf32>
    %76 = vector.broadcast %75 : vector<2x1xf32> to vector<2x8xf32>
    %77 = arith.mulf %65, %76 : vector<2x8xf32>
    %78 = arith.subf %71, %77 : vector<2x8xf32>
    %79 = arith.mulf %78, %78 : vector<2x8xf32>
    %cst_33 = arith.constant dense<0.000000e+00> : vector<2xf32>
    %80 = vector.multi_reduction <add>, %79, %cst_33 [1] : vector<2x8xf32> to vector<2xf32>
    %81 = vector.shape_cast %80 : vector<2xf32> to vector<2x1xf32>
    %82 = math.sqrt %81 : vector<2x1xf32>
    %cst_34 = arith.constant dense<0.000000e+00> : vector<1xf32>
    %83 = vector.multi_reduction <add>, %82, %cst_34 [0] : vector<2x1xf32> to vector<1xf32>
    %84 = vector.shape_cast %83 : vector<1xf32> to vector<1x1xf32>
    %cst_35 = arith.constant 5.000000e-01 : f32
    %85 = vector.broadcast %cst_35 : f32 to vector<1x1xf32>
    %86 = arith.mulf %84, %85 : vector<1x1xf32>
    %87 = arith.addf %63, %86 : vector<1x1xf32>
    %88 = vector.extract_strided_slice %57 {offsets = [0, 24], sizes = [2, 8], strides = [1, 1]} : vector<2x48xf32> to vector<2x8xf32>
    %89 = vector.extract_strided_slice %62 {offsets = [0, 8], sizes = [2, 8], strides = [1, 1]} : vector<2x24xf32> to vector<2x8xf32>
    %90 = arith.mulf %88, %88 : vector<2x8xf32>
    %cst_36 = arith.constant dense<0.000000e+00> : vector<2xf32>
    %91 = vector.multi_reduction <add>, %90, %cst_36 [1] : vector<2x8xf32> to vector<2xf32>
    %92 = vector.shape_cast %91 : vector<2xf32> to vector<2x1xf32>
    %93 = math.rsqrt %92 : vector<2x1xf32>
    %94 = vector.broadcast %93 : vector<2x1xf32> to vector<2x8xf32>
    %95 = arith.mulf %88, %94 : vector<2x8xf32>
    %96 = arith.mulf %89, %89 : vector<2x8xf32>
    %cst_37 = arith.constant dense<0.000000e+00> : vector<2xf32>
    %97 = vector.multi_reduction <add>, %96, %cst_37 [1] : vector<2x8xf32> to vector<2xf32>
    %98 = vector.shape_cast %97 : vector<2xf32> to vector<2x1xf32>
    %99 = math.rsqrt %98 : vector<2x1xf32>
    %100 = vector.broadcast %99 : vector<2x1xf32> to vector<2x8xf32>
    %101 = arith.mulf %89, %100 : vector<2x8xf32>
    %102 = arith.subf %95, %101 : vector<2x8xf32>
    %103 = arith.mulf %102, %102 : vector<2x8xf32>
    %cst_38 = arith.constant dense<0.000000e+00> : vector<2xf32>
    %104 = vector.multi_reduction <add>, %103, %cst_38 [1] : vector<2x8xf32> to vector<2xf32>
    %105 = vector.shape_cast %104 : vector<2xf32> to vector<2x1xf32>
    %106 = math.sqrt %105 : vector<2x1xf32>
    %cst_39 = arith.constant dense<0.000000e+00> : vector<1xf32>
    %107 = vector.multi_reduction <add>, %106, %cst_39 [0] : vector<2x1xf32> to vector<1xf32>
    %108 = vector.shape_cast %107 : vector<1xf32> to vector<1x1xf32>
    %cst_40 = arith.constant 5.000000e-01 : f32
    %109 = vector.broadcast %cst_40 : f32 to vector<1x1xf32>
    %110 = arith.mulf %108, %109 : vector<1x1xf32>
    %111 = arith.addf %87, %110 : vector<1x1xf32>
    %112 = vector.extract_strided_slice %57 {offsets = [0, 40], sizes = [2, 8], strides = [1, 1]} : vector<2x48xf32> to vector<2x8xf32>
    %113 = vector.extract_strided_slice %62 {offsets = [0, 16], sizes = [2, 8], strides = [1, 1]} : vector<2x24xf32> to vector<2x8xf32>
    %114 = arith.mulf %112, %112 : vector<2x8xf32>
    %cst_41 = arith.constant dense<0.000000e+00> : vector<2xf32>
    %115 = vector.multi_reduction <add>, %114, %cst_41 [1] : vector<2x8xf32> to vector<2xf32>
    %116 = vector.shape_cast %115 : vector<2xf32> to vector<2x1xf32>
    %117 = math.rsqrt %116 : vector<2x1xf32>
    %118 = vector.broadcast %117 : vector<2x1xf32> to vector<2x8xf32>
    %119 = arith.mulf %112, %118 : vector<2x8xf32>
    %120 = arith.mulf %113, %113 : vector<2x8xf32>
    %cst_42 = arith.constant dense<0.000000e+00> : vector<2xf32>
    %121 = vector.multi_reduction <add>, %120, %cst_42 [1] : vector<2x8xf32> to vector<2xf32>
    %122 = vector.shape_cast %121 : vector<2xf32> to vector<2x1xf32>
    %123 = math.rsqrt %122 : vector<2x1xf32>
    %124 = vector.broadcast %123 : vector<2x1xf32> to vector<2x8xf32>
    %125 = arith.mulf %113, %124 : vector<2x8xf32>
    %126 = arith.subf %119, %125 : vector<2x8xf32>
    %127 = arith.mulf %126, %126 : vector<2x8xf32>
    %cst_43 = arith.constant dense<0.000000e+00> : vector<2xf32>
    %128 = vector.multi_reduction <add>, %127, %cst_43 [1] : vector<2x8xf32> to vector<2xf32>
    %129 = vector.shape_cast %128 : vector<2xf32> to vector<2x1xf32>
    %130 = math.sqrt %129 : vector<2x1xf32>
    %cst_44 = arith.constant dense<0.000000e+00> : vector<1xf32>
    %131 = vector.multi_reduction <add>, %130, %cst_44 [0] : vector<2x1xf32> to vector<1xf32>
    %132 = vector.shape_cast %131 : vector<1xf32> to vector<1x1xf32>
    %cst_45 = arith.constant 5.000000e-01 : f32
    %133 = vector.broadcast %cst_45 : f32 to vector<1x1xf32>
    %134 = arith.mulf %132, %133 : vector<1x1xf32>
    %135 = arith.addf %111, %134 : vector<1x1xf32>
    %cst_46 = arith.constant 0.333333343 : f32
    %136 = vector.broadcast %cst_46 : f32 to vector<1x1xf32>
    %137 = arith.mulf %135, %136 : vector<1x1xf32>
    %cst_47 = arith.constant 4.000000e-01 : f32
    %138 = vector.broadcast %cst_47 : f32 to vector<1x1xf32>
    %139 = arith.mulf %138, %22 : vector<1x1xf32>
    %cst_48 = arith.constant 3.000000e-01 : f32
    %140 = vector.broadcast %cst_48 : f32 to vector<1x1xf32>
    %141 = arith.mulf %140, %43 : vector<1x1xf32>
    %142 = arith.addf %139, %141 : vector<1x1xf32>
    %cst_49 = arith.constant 3.000000e-01 : f32
    %143 = vector.broadcast %cst_49 : f32 to vector<1x1xf32>
    %144 = arith.mulf %143, %137 : vector<1x1xf32>
    %145 = arith.addf %142, %144 : vector<1x1xf32>
    %146 = tpu.concatenate %145, %22, %43, %137 in 1 : vector<1x1xf32>, vector<1x1xf32>, vector<1x1xf32>, vector<1x1xf32> -> vector<1x4xf32>
    %147 = vector.shape_cast %146 : vector<1x4xf32> to vector<1x4xf32>
    %148 = vector.broadcast %147 : vector<1x4xf32> to vector<2x4xf32>
    %cst_50 = arith.constant 0.000000e+00 : f32
    %149 = vector.broadcast %cst_50 : f32 to vector<2x52xf32>
    %150 = tpu.concatenate %57, %62, %148, %149 in 1 : vector<2x48xf32>, vector<2x24xf32>, vector<2x4xf32>, vector<2x52xf32> -> vector<2x128xf32>
    %c0_51 = arith.constant 0 : index
    %c0_52 = arith.constant 0 : index
    %151 = vector.load %arg6[%c0_51, %c0_52] : memref<2x128xf32, #tpu.memory_space<vmem>>, vector<2x128xf32>
    tpu.vector_store %arg6[%c0_51, %c0_52], %150 {strides = array<i32>} : memref<2x128xf32, #tpu.memory_space<vmem>>, vector<2x128xf32>,
    return
  }
}

</mosaic_0001>

<llo_original>
// kernel: railkd_l_forward.1
$region0: #{railkd_l_forward.1}
  #allocation0 [shape = 'u32[]', space=smem, size = 0x4, offset = 0x4, fixed_abs, tag = 'smem constant byte address 0x4 - core index']
  #allocation1 [shape = 'u32[144,128]{1,0:T(1,128)}', space=vmem, size = 0x12000, scoped, tag = 'internal scratch']
  %s0 = inlined_call_operand.vmem [shape: f32[2,12], index: 0, kind: input, shape index: {}]
  %s1 = inlined_call_operand.vmem [shape: f32[2,8,192], index: 1, kind: input, shape index: {}]
  %s2 = inlined_call_operand.vmem [shape: f32[2,8,48], index: 2, kind: input, shape index: {}]
  %s3 = inlined_call_operand.vmem [shape: f32[192,48], index: 3, kind: input, shape index: {}]
  %s4 = inlined_call_operand.vmem [shape: f32[48,24], index: 4, kind: input, shape index: {}]
  %s5 = inlined_call_operand.vmem [shape: f32[1,72], index: 5, kind: input, shape index: {}]
  %s6 = inlined_call_operand.vmem [shape: f32[2,128], index: 6, kind: output, shape index: {}]
  %s7 = sld [smem:[#allocation0]]
  $region34: #{railkd_l_forward.1} parent=0
    _
  %s9 = ssub.s32 1, %s7
  %s10 = scalar_select 0, %s9, %s7
  // Predicated region
  $region2: #{railkd_l_forward.1} parent=0 // pred_check
    _
  $region3: #{railkd_l_forward.1} parent=0 // pred_check_branch
    %12 = sbr.rel (0) target = $region5
  $region4: #{railkd_l_forward.1} parent=0 // pred_region
    _
  $region5: #{railkd_l_forward.1} parent=0 // pred_fallthru
    _
  // Predicated region
  $region6: #{railkd_l_forward.1} parent=0 // pred_check
    _
  $region7: #{railkd_l_forward.1} parent=0 // pred_check_branch
    %14 = sbr.rel (0) target = $region9
  $region8: #{railkd_l_forward.1} parent=0 // pred_region
    _
  $region9: #{railkd_l_forward.1} parent=0 // pred_fallthru
    _
  // Predicated region
  $region10: #{railkd_l_forward.1} parent=0 // pred_check
    _
  $region11: #{railkd_l_forward.1} parent=0 // pred_check_branch
    %16 = sbr.rel (0) target = $region13
  $region12: #{railkd_l_forward.1} parent=0 // pred_region
    _
  $region13: #{railkd_l_forward.1} parent=0 // pred_fallthru
    _
  // Predicated region
  $region14: #{railkd_l_forward.1} parent=0 // pred_check
    _
  $region15: #{railkd_l_forward.1} parent=0 // pred_check_branch
    %18 = sbr.rel (0) target = $region17
  $region16: #{railkd_l_forward.1} parent=0 // pred_region
    _
  $region17: #{railkd_l_forward.1} parent=0 // pred_fallthru
    _
  // Predicated region
  $region18: #{railkd_l_forward.1} parent=0 // pred_check
    _
  $region19: #{railkd_l_forward.1} parent=0 // pred_check_branch
    %20 = sbr.rel (0) target = $region21
  $region20: #{railkd_l_forward.1} parent=0 // pred_region
    _
  $region21: #{railkd_l_forward.1} parent=0 // pred_fallthru
    _
  // Predicated region
  $region22: #{railkd_l_forward.1} parent=0 // pred_check
    _
  $region23: #{railkd_l_forward.1} parent=0 // pred_check_branch
    %22 = sbr.rel (0) target = $region25
  $region24: #{railkd_l_forward.1} parent=0 // pred_region
    _
  $region25: #{railkd_l_forward.1} parent=0 // pred_fallthru
    _
  %v23 = vld [vmem:[%s0] sm:$0x3]
  %vm24 = vcmask 58400
  %v25 = vsel %vm24, %v23, -inf
  %26 = vmax.xlane.f32.xlu0 %v25
  %v27 = vpop.xlane.xlu0 %26
  %v28 = vsub.f32 %v23, %v27
  %v29 = vmul.f32 %v28, 1.442695
  %v30 = vpow.pop %v29
  %32 = vrot.lane.b32.xlu0 %v30, 124
  %v33 = vpop.permute.xlu0 %32
  %vm35 = vcmask 25600
  %v36 = vsel %vm35, %v33, 0.0
  %37 = vadd.xlane.f32.xlu0 %v36
  %v38 = vpop.xlane.xlu0 %37
  %v39 = vlog2.pop %v38
  %v40 = vmul.f32 %v39, 0.6931472
  %v41 = vsub.f32 %v28, %v40
  %43 = vrot.lane.b32.xlu0 %v41, 4
  %v44 = vpop.permute.xlu0 %43
  %v46 = vmul.f32 %v23, %v44
  %48 = vrot.lane.b32.xlu0 %v46, 120
  %v49 = vpop.permute.xlu0 %48
  %v51 = vsel %vm35, %v49, 0.0
  %52 = vadd.xlane.f32.xlu0 %v51
  %v53 = vpop.xlane.xlu0 %52
  %v54 = vsub.f32 0.0, %v53
  %vm55 = vcmask 1041408
  %v56 = vsel %vm55, %v54, 0.0
  %v57 = vrot.slane %v56, 4
  %v58 = vadd.f32 %v56, %v57
  %v59 = vrot.slane %v58, 2
  %v60 = vadd.f32 %v58, %v59
  %v61 = vrot.slane %v60, 1
  %v62 = vadd.f32 %v60, %v61
  %v63 = vmul.f32 %v62, 0.5
  %v64 = vsel %vm35, %v23, -inf
  %65 = vmax.xlane.f32.xlu0 %v64
  %v66 = vpop.xlane.xlu0 %65
  %v67 = vsub.f32 %v23, %v66
  %v68 = vmul.f32 %v67, 1.442695
  %v69 = vpow.pop %v68
  %v70 = vsel %vm35, %v69, 0.0
  %71 = vadd.xlane.f32.xlu0 %v70
  %v72 = vpop.xlane.xlu0 %71
  %v73 = vlog2.pop %v72
  %v74 = vmul.f32 %v73, 0.6931472
  %v75 = vsub.f32 %v67, %v74
  %v76 = vmul.f32 %v75, 1.442695
  %v77 = vpow.pop %v76
  %v78 = vmul.f32 %v77, 0.5
  %79 = vrot.lane.b32.xlu0 %v41, 124
  %v80 = vpop.permute.xlu0 %79
  %v82 = vsub.f32 %v75, %v80
  %v83 = vmul.f32 %v78, %v82
  %v84 = vsel %vm35, %v83, 0.0
  %85 = vadd.xlane.f32.xlu0 %v84
  %v86 = vpop.xlane.xlu0 %85
  %v87 = vsel %vm55, %v86, 0.0
  %v88 = vrot.slane %v87, 4
  %v89 = vadd.f32 %v87, %v88
  %v90 = vrot.slane %v89, 2
  %v91 = vadd.f32 %v89, %v90
  %v92 = vrot.slane %v91, 1
  %v93 = vadd.f32 %v91, %v92
  %v94 = vmul.f32 %v93, 0.5
  %v95 = vld [vmem:[%s1] sm:$0xff]
  %v96 = vld [vmem:[%s1 + $0x8] sm:$0xff]
  %v97 = vld [vmem:[%s1 + $0x10] sm:$0xff]
  %v98 = vld [vmem:[%s1 + $0x18] sm:$0xff]
  %v99 = vrot.slane %v95, 4
  %v100 = vadd.f32 %v95, %v99
  %v101 = vrot.slane %v100, 2
  %v102 = vadd.f32 %v100, %v101
  %v103 = vrot.slane %v102, 1
  %v104 = vadd.f32 %v102, %v103
  %vm105 = vcmask 523264
  %v106 = vsel %vm105, %v96, 0.0
  %v107 = vrot.slane %v106, 4
  %v108 = vadd.f32 %v106, %v107
  %v109 = vrot.slane %v108, 2
  %v110 = vadd.f32 %v108, %v109
  %v111 = vrot.slane %v110, 1
  %v112 = vadd.f32 %v110, %v111
  %v113 = vrot.slane %v97, 4
  %v114 = vadd.f32 %v97, %v113
  %v115 = vrot.slane %v114, 2
  %v116 = vadd.f32 %v114, %v115
  %v117 = vrot.slane %v116, 1
  %v118 = vadd.f32 %v116, %v117
  %v119 = vsel %vm105, %v98, 0.0
  %v120 = vrot.slane %v119, 4
  %v121 = vadd.f32 %v119, %v120
  %v122 = vrot.slane %v121, 2
  %v123 = vadd.f32 %v121, %v122
  %v124 = vrot.slane %v123, 1
  %v125 = vadd.f32 %v123, %v124
  %v126 = vrcp.pop 8.0
  %v127 = vmul.f32 %v104, %v126
  %v128 = vmul.f32 %v112, %v126
  %v129 = vmul.f32 %v118, %v126
  %v130 = vmul.f32 %v125, %v126
  %v131 = vld [vmem:[%s2] sm:$0xff]
  %v132 = vld [vmem:[%s2 + $0x8] sm:$0xff]
  %vm133 = vcmask 392192
  %v134 = vsel %vm133, %v131, 0.0
  %v135 = vrot.slane %v134, 4
  %v136 = vadd.f32 %v134, %v135
  %v137 = vrot.slane %v136, 2
  %v138 = vadd.f32 %v136, %v137
  %v139 = vrot.slane %v138, 1
  %v140 = vadd.f32 %v138, %v139
  %v141 = vsel %vm133, %v132, 0.0
  %v142 = vrot.slane %v141, 4
  %v143 = vadd.f32 %v141, %v142
  %v144 = vrot.slane %v143, 2
  %v145 = vadd.f32 %v143, %v144
  %v146 = vrot.slane %v145, 1
  %v147 = vadd.f32 %v145, %v146
  %v148 = vmul.f32 %v140, %v126
  %v149 = vmul.f32 %v147, %v126
  %v150 = vld [vmem:[%s5] sm:$0x1]
  %v151 = vld [vmem:[%s3] sm:$0xff]
  %v152 = vld [vmem:[%s3 + $0x8] sm:$0xff]
  %v153 = vld [vmem:[%s3 + $0x10] sm:$0xff]
  %v154 = vld [vmem:[%s3 + $0x18] sm:$0xff]
  %v155 = vld [vmem:[%s3 + $0x20] sm:$0xff]
  %v156 = vld [vmem:[%s3 + $0x28] sm:$0xff]
  %v157 = vld [vmem:[%s3 + $0x30] sm:$0xff]
  %v158 = vld [vmem:[%s3 + $0x38] sm:$0xff]
  %v159 = vld [vmem:[%s3 + $0x40] sm:$0xff]
  %v160 = vld [vmem:[%s3 + $0x48] sm:$0xff]
  %v161 = vld [vmem:[%s3 + $0x50] sm:$0xff]
  %v162 = vld [vmem:[%s3 + $0x58] sm:$0xff]
  %v163 = vld [vmem:[%s3 + $0x60] sm:$0xff]
  %v164 = vld [vmem:[%s3 + $0x68] sm:$0xff]
  %v165 = vld [vmem:[%s3 + $0x70] sm:$0xff]
  %v166 = vld [vmem:[%s3 + $0x78] sm:$0xff]
  %v167 = vld [vmem:[%s3 + $0x80] sm:$0xff]
  %v168 = vld [vmem:[%s3 + $0x88] sm:$0xff]
  %v169 = vld [vmem:[%s3 + $0x90] sm:$0xff]
  %v170 = vld [vmem:[%s3 + $0x98] sm:$0xff]
  %v171 = vld [vmem:[%s3 + $0xa0] sm:$0xff]
  %v172 = vld [vmem:[%s3 + $0xa8] sm:$0xff]
  %v173 = vld [vmem:[%s3 + $0xb0] sm:$0xff]
  %v174 = vld [vmem:[%s3 + $0xb8] sm:$0xff]
  %v176 = vlaneseq
  %v177 = vshrl.u32 %v176, 7
  %v178 = vsub.s32 0, %v177
  %v179 = vrot.slane %v150, %v178
  %vm185 = vcmask 1041409
  %v186 = vsel %vm185, %v129, %v127
  %v187 = vsel %vm185, %v130, %v128
  %v189 = vsel %vm105, %v187, 0
  %191 = vmatprep.subr.mxu0 0.0
  %192 = vmatpush1.msra.mxu0 %v166
  %193 = vmatprep.subr.mxu0 0.0
  %194 = vmatpush1.msra.mxu0 %v165
  %195 = vmatprep.subr.mxu0 0.0
  %196 = vmatpush1.msra.mxu0 %v164
  %197 = vmatprep.subr.mxu0 0.0
  %198 = vmatpush1.msra.mxu0 %v163
  %199 = vmatprep.subr.mxu0 0.0
  %200 = vmatpush1.msra.mxu0 %v162
  %201 = vmatprep.subr.mxu0 0.0
  %202 = vmatpush1.msra.mxu0 %v161
  %203 = vmatprep.subr.mxu0 0.0
  %204 = vmatpush1.msra.mxu0 %v160
  %205 = vmatprep.subr.mxu0 0.0
  %206 = vmatpush1.msra.mxu0 %v159
  %207 = vmatprep.subr.mxu0 0.0
  %208 = vmatpush1.msra.mxu0 %v158
  %209 = vmatprep.subr.mxu0 0.0
  %210 = vmatpush1.msra.mxu0 %v157
  %211 = vmatprep.subr.mxu0 0.0
  %212 = vmatpush1.msra.mxu0 %v156
  %213 = vmatprep.subr.mxu0 0.0
  %214 = vmatpush1.msra.mxu0 %v155
  %215 = vmatprep.subr.mxu0 0.0
  %216 = vmatpush1.msra.mxu0 %v154
  %217 = vmatprep.subr.mxu0 0.0
  %218 = vmatpush1.msra.mxu0 %v153
  %219 = vmatprep.subr.mxu0 0.0
  %220 = vmatpush1.msra.mxu0 %v152
  %221 = vmatprep.subr.mxu0 0.0
  %222 = vmatpush1.msra.mxu0 %v151
  %223 = vmatprep.subr.mxu0 0.0
  %224 = vmatpush2.msra.mxu0 0.0
  %225 = vmatprep.subr.mxu0 0.0
  %226 = vmatpush2.msra.mxu0 0.0
  %227 = vmatprep.subr.mxu0 0.0
  %228 = vmatpush2.msra.mxu0 0.0
  %229 = vmatprep.subr.mxu0 0.0
  %230 = vmatpush2.msra.mxu0 0.0
  %231 = vmatprep.subr.mxu0 0.0
  %232 = vmatpush2.msra.mxu0 0.0
  %233 = vmatprep.subr.mxu0 0.0
  %234 = vmatpush2.msra.mxu0 0.0
  %235 = vmatprep.subr.mxu0 0.0
  %236 = vmatpush2.msra.mxu0 0.0
  %237 = vmatprep.subr.mxu0 0.0
  %238 = vmatpush2.msra.mxu0 0.0
  %239 = vmatprep.subr.mxu0 0.0
  %240 = vmatpush2.msra.mxu0 %v174
  %241 = vmatprep.subr.mxu0 0.0
  %242 = vmatpush2.msra.mxu0 %v173
  %243 = vmatprep.subr.mxu0 0.0
  %244 = vmatpush2.msra.mxu0 %v172
  %245 = vmatprep.subr.mxu0 0.0
  %246 = vmatpush2.msra.mxu0 %v171
  %247 = vmatprep.subr.mxu0 0.0
  %248 = vmatpush2.msra.mxu0 %v170
  %249 = vmatprep.subr.mxu0 0.0
  %250 = vmatpush2.msra.mxu0 %v169
  %251 = vmatprep.subr.mxu0 0.0
  %252 = vmatpush2.msra.mxu0 %v168
  %253 = vmatprep.subr.mxu0 0.0
  %254 = vmatpush2.msra.mxu0 %v167
  %255 = vmatprep.mubr.f32.mxu0 %v189
  %256 = vmatmul.mubr.f32.gmra.mxu0 %v186
  %v257 = vpop.f32.mrf.mxu0
  %v258 = vadd.f32 %v179, %v257
  %v259 = vpop.f32.mrf.mxu0
  %260 = vdwg.mxu0
  %v261 = vld [vmem:[%s4] sm:$0xff]
  %v262 = vld [vmem:[%s4 + $0x8] sm:$0xff]
  %v263 = vld [vmem:[%s4 + $0x10] sm:$0xff]
  %v264 = vld [vmem:[%s4 + $0x18] sm:$0xff]
  %v265 = vld [vmem:[%s4 + $0x20] sm:$0xff]
  %v266 = vld [vmem:[%s4 + $0x28] sm:$0xff]
  %v269 = vsel %vm185, %v149, %v148
  %270 = vrot.lane.b32.xlu0 %v179, 80
  %v271 = vpop.permute.xlu0 %270
  %v273 = vsel %vm133, %v269, 0
  %275 = vmatprep.subr.mxu0 0.0
  %276 = vmatpush1.msra.mxu0 0.0
  %277 = vmatprep.subr.mxu0 0.0
  %278 = vmatpush1.msra.mxu0 0.0
  %279 = vmatprep.subr.mxu0 0.0
  %280 = vmatpush1.msra.mxu0 0.0
  %281 = vmatprep.subr.mxu0 0.0
  %282 = vmatpush1.msra.mxu0 0.0
  %283 = vmatprep.subr.mxu0 0.0
  %284 = vmatpush1.msra.mxu0 0.0
  %285 = vmatprep.subr.mxu0 0.0
  %286 = vmatpush1.msra.mxu0 0.0
  %287 = vmatprep.subr.mxu0 0.0
  %288 = vmatpush1.msra.mxu0 0.0
  %289 = vmatprep.subr.mxu0 0.0
  %290 = vmatpush1.msra.mxu0 0.0
  %291 = vmatprep.subr.mxu0 0.0
  %292 = vmatpush1.msra.mxu0 0.0
  %293 = vmatprep.subr.mxu0 0.0
  %294 = vmatpush1.msra.mxu0 0.0
  %295 = vmatprep.subr.mxu0 0.0
  %296 = vmatpush1.msra.mxu0 %v266
  %297 = vmatprep.subr.mxu0 0.0
  %298 = vmatpush1.msra.mxu0 %v265
  %299 = vmatprep.subr.mxu0 0.0
  %300 = vmatpush1.msra.mxu0 %v264
  %301 = vmatprep.subr.mxu0 0.0
  %302 = vmatpush1.msra.mxu0 %v263
  %303 = vmatprep.subr.mxu0 0.0
  %304 = vmatpush1.msra.mxu0 %v262
  %305 = vmatprep.subr.mxu0 0.0
  %306 = vmatpush1.msra.mxu0 %v261
  %307 = vmatprep.subr.mxu0 0.0
  %308 = vmatpush2.msra.mxu0 0.0
  %309 = vmatprep.subr.mxu0 0.0
  %310 = vmatpush2.msra.mxu0 0.0
  %311 = vmatprep.subr.mxu0 0.0
  %312 = vmatpush2.msra.mxu0 0.0
  %313 = vmatprep.subr.mxu0 0.0
  %314 = vmatpush2.msra.mxu0 0.0
  %315 = vmatprep.subr.mxu0 0.0
  %316 = vmatpush2.msra.mxu0 0.0
  %317 = vmatprep.subr.mxu0 0.0
  %318 = vmatpush2.msra.mxu0 0.0
  %319 = vmatprep.subr.mxu0 0.0
  %320 = vmatpush2.msra.mxu0 0.0
  %321 = vmatprep.subr.mxu0 0.0
  %322 = vmatpush2.msra.mxu0 0.0
  %323 = vmatprep.subr.mxu0 0.0
  %324 = vmatpush2.msra.mxu0 0.0
  %325 = vmatprep.subr.mxu0 0.0
  %326 = vmatpush2.msra.mxu0 0.0
  %327 = vmatprep.subr.mxu0 0.0
  %328 = vmatpush2.msra.mxu0 0.0
  %329 = vmatprep.subr.mxu0 0.0
  %330 = vmatpush2.msra.mxu0 0.0
  %331 = vmatprep.subr.mxu0 0.0
  %332 = vmatpush2.msra.mxu0 0.0
  %333 = vmatprep.subr.mxu0 0.0
  %334 = vmatpush2.msra.mxu0 0.0
  %335 = vmatprep.subr.mxu0 0.0
  %336 = vmatpush2.msra.mxu0 0.0
  %337 = vmatprep.subr.mxu0 0.0
  %338 = vmatpush2.msra.mxu0 0.0
  %339 = vmatprep.mubr.f32.mxu0 0.0
  %340 = vmatmul.mubr.f32.gmra.mxu0 %v273
  %v341 = vpop.f32.mrf.mxu0
  %v342 = vadd.f32 %v271, %v341
  %v343 = vpop.f32.mrf.mxu0
  %344 = vdwg.mxu0
  %v345 = vmul.f32 %v258, %v258
  %347 = vrot.lane.b32.xlu0 %v345, 120
  %v348 = vpop.permute.xlu0 %347
  %vm350 = vcmask 58368
  %v351 = vsel %vm350, %v348, 0.0
  %352 = vadd.xlane.f32.xlu0 %v351
  %v353 = vpop.xlane.xlu0 %352
  %v354 = vrsqrt.pop %v353
  %v355 = vmul.f32 %v258, %v354
  %v356 = vmul.f32 %v342, %v342
  %v357 = vsel %vm350, %v356, 0.0
  %358 = vadd.xlane.f32.xlu0 %v357
  %v359 = vpop.xlane.xlu0 %358
  %v360 = vrsqrt.pop %v359
  %v361 = vmul.f32 %v342, %v360
  %363 = vrot.lane.b32.xlu0 %v361, 8
  %v364 = vpop.permute.xlu0 %363
  %v366 = vsub.f32 %v355, %v364
  %v367 = vmul.f32 %v366, %v366
  %369 = vrot.lane.b32.xlu0 %v367, 120
  %v370 = vpop.permute.xlu0 %369
  %v372 = vsel %vm350, %v370, 0.0
  %373 = vadd.xlane.f32.xlu0 %v372
  %v374 = vpop.xlane.xlu0 %373
  %v375 = vrsqrt.pop %v374
  %v376 = vmul.f32 %v374, %v375
  %vm377 = vcmp.eq.f32.partialorder %v374, inf
  %v378 = vsel %vm377, %v374, %v376
  %vm379 = vcmp.eq.f32.partialorder %v374, 0.0
  %v380 = vand.u32 %v374, 2147483648
  %v381 = vsel %vm379, %v380, %v378
  %v382 = vsel %vm55, %v381, 0.0
  %v383 = vrot.slane %v382, 4
  %v384 = vadd.f32 %v382, %v383
  %v385 = vrot.slane %v384, 2
  %v386 = vadd.f32 %v384, %v385
  %v387 = vrot.slane %v386, 1
  %v388 = vadd.f32 %v386, %v387
  %v389 = vmul.f32 %v388, 0.5
  %v390 = vadd.f32 %v389, 0.0
  %391 = vrot.lane.b32.xlu0 %v345, 104
  %v392 = vpop.permute.xlu0 %391
  %v394 = vsel %vm350, %v392, 0.0
  %395 = vadd.xlane.f32.xlu0 %v394
  %v396 = vpop.xlane.xlu0 %395
  %v397 = vrsqrt.pop %v396
  %v398 = vmul.f32 %v258, %v397
  %400 = vrot.lane.b32.xlu0 %v356, 120
  %v401 = vpop.permute.xlu0 %400
  %v403 = vsel %vm350, %v401, 0.0
  %404 = vadd.xlane.f32.xlu0 %v403
  %v405 = vpop.xlane.xlu0 %404
  %v406 = vrsqrt.pop %v405
  %v407 = vmul.f32 %v342, %v406
  %409 = vrot.lane.b32.xlu0 %v407, 16
  %v410 = vpop.permute.xlu0 %409
  %v412 = vsub.f32 %v398, %v410
  %v413 = vmul.f32 %v412, %v412
  %415 = vrot.lane.b32.xlu0 %v413, 104
  %v416 = vpop.permute.xlu0 %415
  %v418 = vsel %vm350, %v416, 0.0
  %419 = vadd.xlane.f32.xlu0 %v418
  %v420 = vpop.xlane.xlu0 %419
  %v421 = vrsqrt.pop %v420
  %v422 = vmul.f32 %v420, %v421
  %vm423 = vcmp.eq.f32.partialorder %v420, inf
  %v424 = vsel %vm423, %v420, %v422
  %vm425 = vcmp.eq.f32.partialorder %v420, 0.0
  %v426 = vand.u32 %v420, 2147483648
  %v427 = vsel %vm425, %v426, %v424
  %v428 = vsel %vm55, %v427, 0.0
  %v429 = vrot.slane %v428, 4
  %v430 = vadd.f32 %v428, %v429
  %v431 = vrot.slane %v430, 2
  %v432 = vadd.f32 %v430, %v431
  %v433 = vrot.slane %v432, 1
  %v434 = vadd.f32 %v432, %v433
  %v435 = vmul.f32 %v434, 0.5
  %v436 = vadd.f32 %v390, %v435
  %437 = vrot.lane.b32.xlu0 %v345, 88
  %v438 = vpop.permute.xlu0 %437
  %v440 = vsel %vm350, %v438, 0.0
  %441 = vadd.xlane.f32.xlu0 %v440
  %v442 = vpop.xlane.xlu0 %441
  %v443 = vrsqrt.pop %v442
  %v444 = vmul.f32 %v258, %v443
  %445 = vrot.lane.b32.xlu0 %v356, 112
  %v446 = vpop.permute.xlu0 %445
  %v448 = vsel %vm350, %v446, 0.0
  %449 = vadd.xlane.f32.xlu0 %v448
  %v450 = vpop.xlane.xlu0 %449
  %v451 = vrsqrt.pop %v450
  %v452 = vmul.f32 %v342, %v451
  %454 = vrot.lane.b32.xlu0 %v452, 24
  %v455 = vpop.permute.xlu0 %454
  %v457 = vsub.f32 %v444, %v455
  %v458 = vmul.f32 %v457, %v457
  %460 = vrot.lane.b32.xlu0 %v458, 88
  %v461 = vpop.permute.xlu0 %460
  %v463 = vsel %vm350, %v461, 0.0
  %464 = vadd.xlane.f32.xlu0 %v463
  %v465 = vpop.xlane.xlu0 %464
  %v466 = vrsqrt.pop %v465
  %v467 = vmul.f32 %v465, %v466
  %vm468 = vcmp.eq.f32.partialorder %v465, inf
  %v469 = vsel %vm468, %v465, %v467
  %vm470 = vcmp.eq.f32.partialorder %v465, 0.0
  %v471 = vand.u32 %v465, 2147483648
  %v472 = vsel %vm470, %v471, %v469
  %v473 = vsel %vm55, %v472, 0.0
  %v474 = vrot.slane %v473, 4
  %v475 = vadd.f32 %v473, %v474
  %v476 = vrot.slane %v475, 2
  %v477 = vadd.f32 %v475, %v476
  %v478 = vrot.slane %v477, 1
  %v479 = vadd.f32 %v477, %v478
  %v480 = vmul.f32 %v479, 0.5
  %v481 = vadd.f32 %v436, %v480
  %v482 = vmul.f32 %v481, 0.33333334
  %v483 = vmul.f32 %v63, 0.4
  %v484 = vmul.f32 %v94, 0.3
  %v485 = vadd.f32 %v483, %v484
  %v486 = vmul.f32 %v482, 0.3
  %v487 = vadd.f32 %v485, %v486
  %vm488 = vcmask 7168
  %v489 = vsel %vm488, %v487, %v63
  %vm490 = vcmask 15360
  %v491 = vsel %vm490, %v489, %v94
  %vm492 = vcmask 23552
  %v493 = vsel %vm492, %v491, %v482
  %v494 = vlaneseq
  %v495 = vshrl.u32 %v494, 7
  %v496 = vsub.s32 0, %v495
  %v497 = vrot.slane %v493, %v496
  %499 = vrot.lane.b32.xlu0 %v342, 48
  %v500 = vpop.permute.xlu0 %499
  %503 = vrot.lane.b32.xlu0 %v497, 72
  %v504 = vpop.permute.xlu0 %503
  %v506 = vsel %vm133, %v258, %v500
  %vm507 = vcmask 588800
  %v508 = vsel %vm507, %v506, %v504
  %vm509 = vcmask 621568
  %v510 = vsel %vm509, %v508, 0.0
  %511 = vst [vmem:[%s6] sm:$0x3] %v510
  // Predicated region
  $region26: #{railkd_l_forward.1} parent=0 // pred_check
    _
  $region27: #{railkd_l_forward.1} parent=0 // pred_check_branch
    %513 = sbr.rel (0) target = $region29
  $region28: #{railkd_l_forward.1} parent=0 // pred_region
    _
  $region29: #{railkd_l_forward.1} parent=0 // pred_fallthru
    _
  // Predicated region
  $region30: #{railkd_l_forward.1} parent=0 // pred_check
    _
  $region31: #{railkd_l_forward.1} parent=0 // pred_check_branch
    %515 = sbr.rel (0) target = $region33
  $region32: #{railkd_l_forward.1} parent=0 // pred_region
    _
  $region33: #{railkd_l_forward.1} parent=0 // pred_fallthru
    _

</llo_original>
